<compile_context>
chip_gen: v5e
topology: v5e:2x2
jax: 0.10.0
libtpu: 0.0.40
codegen_flags: <defaults>
</compile_context>

<pallas_src>
import math
import functools

import jax
import jax.numpy as jnp
from jax.experimental import pallas as pl
from jax.experimental.pallas import tpu as pltpu


def _mha_kernel(x_ref, y_ref,
                wq_ref, bq_ref, wk_ref, bk_ref, wv_ref, bv_ref, wo_ref, bo_ref,
                out_ref, scores_ref,
                *, n_heads, norm_fact):
    # x_ref / y_ref : (L, D)  bf16    (batch dim squeezed by BlockSpec)
    # wq_ref/wk_ref : (H, D, dk) bf16   bq_ref/bk_ref : (H, 1, dk) f32
    # wv_ref        : (H, D, dv) bf16   bv_ref        : (H, 1, dv) f32
    # wo_ref        : (H, dv, D) bf16   bo_ref        : (1, D)    f32
    # out_ref       : (L, D) f32        scores_ref    : (H, L, L) f32
    H = n_heads
    L, D = x_ref.shape

    x = x_ref[...]
    y = y_ref[...]
    # Major-axis replication only (no sublane/lane relayout) -> head-major batched matmuls.
    xh = jnp.broadcast_to(x[None, :, :], (H, L, D))
    yh = jnp.broadcast_to(y[None, :, :], (H, L, D))

    # Head-major projections (batched over heads), f32 accumulation on the MXU.
    q = jnp.einsum('hld,hdk->hlk', xh, wq_ref[...],
                   preferred_element_type=jnp.float32) + bq_ref[...]
    k = jnp.einsum('hld,hdk->hlk', xh, wk_ref[...],
                   preferred_element_type=jnp.float32) + bk_ref[...]
    v = jnp.einsum('hld,hdk->hlk', yh, wv_ref[...],
                   preferred_element_type=jnp.float32) + bv_ref[...]

    # Fold the 1/sqrt(d_model) scale into Q before the QK^T matmul (L*dk mults, not L*L).
    qh = (q * norm_fact).astype(jnp.bfloat16)
    kh = k.astype(jnp.bfloat16)
    vh = v.astype(jnp.bfloat16)

    # scores[h, l, s] = sum_e qh[h,l,e] * kh[h,s,e]
    s = jnp.einsum('hle,hse->hls', qh, kh, preferred_element_type=jnp.float32)
    s = s - jnp.max(s, axis=-1, keepdims=True)            # XLU lane-reduce
    e = jnp.exp(s)                                         # EUP
    p = e * pl.reciprocal(jnp.sum(e, axis=-1, keepdims=True), approx=True)
    scores_ref[...] = p                                    # (H, L, L), written once

    # ctx[h, l, d] = sum_s p[h,l,s] * vh[h,s,d]
    ctx = jnp.einsum('hls,hsd->hld', p.astype(jnp.bfloat16), vh,
                     preferred_element_type=jnp.float32)

    # Output projection accumulated over heads (no concat of lane-narrow tiles):
    # out[l, m] = sum_h sum_d ctx[h,l,d] * wo[h,d,m] + bo[m]
    per_head = jnp.einsum('hld,hdm->hlm', ctx.astype(jnp.bfloat16), wo_ref[...],
                          preferred_element_type=jnp.float32)
    out_ref[...] = jnp.sum(per_head, axis=0) + bo_ref[...]


def multihead_attention(x, y, params, *, n_heads, dim_k, dim_v):
    """x, y: (B, L, D) float32. Returns (output: (B, L, D), scores: (B, H, L, L))."""
    B, L, D = x.shape
    HK = n_heads * dim_k
    HV = n_heads * dim_v
    wq, bq, wk, bk, wv, bv, wo, bo = params
    norm_fact = 1.0 / math.sqrt(D)

    # Pre-split heads on the weights (tiny, one-time, outside the kernel) so the kernel
    # never slices the lane axis per head, and pre-cast matmul operands to bf16 so the
    # kernel DMAs half the bytes and does no per-step casts.
    wqh = wq.reshape(D, n_heads, dim_k).transpose(1, 0, 2).astype(jnp.bfloat16)  # (H, D, dk)
    wkh = wk.reshape(D, n_heads, dim_k).transpose(1, 0, 2).astype(jnp.bfloat16)  # (H, D, dk)
    wvh = wv.reshape(D, n_heads, dim_v).transpose(1, 0, 2).astype(jnp.bfloat16)  # (H, D, dv)
    woh = wo.reshape(n_heads, dim_v, D).astype(jnp.bfloat16)                     # (H, dv, D)
    bqh = bq.reshape(n_heads, 1, dim_k)                                          # f32
    bkh = bk.reshape(n_heads, 1, dim_k)
    bvh = bv.reshape(n_heads, 1, dim_v)
    x_bf = x.astype(jnp.bfloat16)
    y_bf = y.astype(jnp.bfloat16)

    kernel = functools.partial(_mha_kernel, n_heads=n_heads, norm_fact=norm_fact)

    full = lambda shape: pl.BlockSpec(shape, lambda b: (0,) * len(shape))

    flops = 2 * B * (L * D * (2 * HK + HV)                  # Q/K/V projections
                     + n_heads * L * L * (dim_k + dim_v)    # QK^T and P@V
                     + L * HV * D)                          # output projection
    transcendentals = B * n_heads * L * L                   # softmax exp
    bytes_accessed = (2 * (2 * B * L * D)                   # x, y (bf16)
                      + 4 * B * L * D                       # out (f32)
                      + 4 * B * n_heads * L * L             # scores writeback (f32)
                      + 2 * (D * (2 * HK + HV) + HV * D)    # weights (bf16)
                      + 4 * (2 * HK + HV + D))              # biases (f32)

    out, scores = pl.pallas_call(
        kernel,
        out_shape=(
            jax.ShapeDtypeStruct((B, L, D), jnp.float32),
            jax.ShapeDtypeStruct((B, n_heads, L, L), jnp.float32),
        ),
        grid_spec=pltpu.PrefetchScalarGridSpec(
            num_scalar_prefetch=0,
            grid=(B,),
            in_specs=[
                pl.BlockSpec((None, L, D), lambda b: (b, 0, 0)),        # x (batch-squeezed)
                pl.BlockSpec((None, L, D), lambda b: (b, 0, 0)),        # y
                full((n_heads, D, dim_k)), full((n_heads, 1, dim_k)),   # Wq, bq
                full((n_heads, D, dim_k)), full((n_heads, 1, dim_k)),   # Wk, bk
                full((n_heads, D, dim_v)), full((n_heads, 1, dim_v)),   # Wv, bv
                full((n_heads, dim_v, D)), full((1, D)),                # Wo, bo
            ],
            out_specs=[
                pl.BlockSpec((None, L, D), lambda b: (b, 0, 0)),              # output
                pl.BlockSpec((None, n_heads, L, L), lambda b: (b, 0, 0, 0)),  # scores
            ],
        ),
        compiler_params=pltpu.CompilerParams(dimension_semantics=("parallel",)),
        cost_estimate=pl.CostEstimate(flops=flops,
                                      transcendentals=transcendentals,
                                      bytes_accessed=bytes_accessed),
    )(x_bf, y_bf, wqh, bqh, wkh, bkh, wvh, bvh, woh, bo)
    return out, scores


def _reference(x, y, params, *, n_heads, dim_k, dim_v):
    B, L, D = x.shape
    wq, bq, wk, bk, wv, bv, wo, bo = params
    Q = (x @ wq + bq).reshape(B, L, n_heads, dim_k)
    K = (x @ wk + bk).reshape(B, L, n_heads, dim_k)
    V = (y @ wv + bv).reshape(B, L, n_heads, dim_v)
    scores = jnp.einsum('blhe,bshe->bhls', Q, K) / math.sqrt(D)
    scores = jax.nn.softmax(scores, axis=-1)
    out = jnp.einsum('bhls,bshd->blhd', scores, V).reshape(B, L, -1)
    return out @ wo + bo, scores


if __name__ == "__main__":
    B, L, D = 2, 8, 32
    n_heads, dim_k, dim_v = 4, 8, 8
    HK, HV = n_heads * dim_k, n_heads * dim_v

    key = jax.random.PRNGKey(0)
    ks = jax.random.split(key, 10)

    def lin(kw, kb, fan_in, fan_out):
        bound = 1.0 / math.sqrt(fan_in)
        w = jax.random.uniform(kw, (fan_in, fan_out), jnp.float32, -bound, bound)
        b = jax.random.uniform(kb, (1, fan_out), jnp.float32, -bound, bound)
        return w, b

    wq, bq = lin(ks[0], ks[1], D, HK)
    wk, bk = lin(ks[2], ks[3], D, HK)
    wv, bv = lin(ks[4], ks[5], D, HV)
    wo, bo = lin(ks[6], ks[7], HV, D)
    params = (wq, bq, wk, bk, wv, bv, wo, bo)

    x = jax.random.normal(ks[8], (B, L, D), jnp.float32)
    y = jax.random.normal(ks[9], (B, L, D), jnp.float32)

    out, scores = multihead_attention(x, y, params, n_heads=n_heads,
                                      dim_k=dim_k, dim_v=dim_v)
    jax.block_until_ready((out, scores))

    ref_out, ref_scores = _reference(x, y, params, n_heads=n_heads,
                                     dim_k=dim_k, dim_v=dim_v)
    # bf16 MXU inputs -> loosened tolerances vs the f32 reference.
    assert jnp.allclose(out, ref_out, atol=5e-2, rtol=5e-2)
    assert jnp.allclose(scores, ref_scores, atol=3e-2, rtol=3e-2)

    print("KERNEL_OK")
</pallas_src>

<mosaic_0001>
module attributes {stable_mosaic.version = 11 : i64} {
  func.func @_mha_kernel(%arg0: i32, %arg1: memref<1x8x32xbf16, #tpu.memory_space<vmem>>, %arg2: memref<1x8x32xbf16, #tpu.memory_space<vmem>>, %arg3: memref<4x32x8xbf16, #tpu.memory_space<vmem>>, %arg4: memref<4x1x8xf32, #tpu.memory_space<vmem>>, %arg5: memref<4x32x8xbf16, #tpu.memory_space<vmem>>, %arg6: memref<4x1x8xf32, #tpu.memory_space<vmem>>, %arg7: memref<4x32x8xbf16, #tpu.memory_space<vmem>>, %arg8: memref<4x1x8xf32, #tpu.memory_space<vmem>>, %arg9: memref<4x8x32xbf16, #tpu.memory_space<vmem>>, %arg10: memref<1x32xf32, #tpu.memory_space<vmem>>, %arg11: memref<1x8x32xf32, #tpu.memory_space<vmem>>, %arg12: memref<1x4x8x8xf32, #tpu.memory_space<vmem>>) attributes {dimension_semantics = [#tpu.dimension_semantics<parallel>], iteration_bounds = array<i64: 2>, scalar_prefetch = 0 : i64, scratch_operands = 0 : i64, tpu.core_type = #tpu.core_type<tc>, window_params = [{transform_indices = @transform_0, window_bounds = array<i64: 1, 8, 32>}, {transform_indices = @transform_1, window_bounds = array<i64: 1, 8, 32>}, {pipeline_mode = #tpu.pipeline_mode<synchronous>, transform_indices = @transform_2, window_bounds = array<i64: 4, 32, 8>}, {pipeline_mode = #tpu.pipeline_mode<synchronous>, transform_indices = @transform_3, window_bounds = array<i64: 4, 1, 8>}, {pipeline_mode = #tpu.pipeline_mode<synchronous>, transform_indices = @transform_4, window_bounds = array<i64: 4, 32, 8>}, {pipeline_mode = #tpu.pipeline_mode<synchronous>, transform_indices = @transform_5, window_bounds = array<i64: 4, 1, 8>}, {pipeline_mode = #tpu.pipeline_mode<synchronous>, transform_indices = @transform_6, window_bounds = array<i64: 4, 32, 8>}, {pipeline_mode = #tpu.pipeline_mode<synchronous>, transform_indices = @transform_7, window_bounds = array<i64: 4, 1, 8>}, {pipeline_mode = #tpu.pipeline_mode<synchronous>, transform_indices = @transform_8, window_bounds = array<i64: 4, 8, 32>}, {pipeline_mode = #tpu.pipeline_mode<synchronous>, transform_indices = @transform_9, window_bounds = array<i64: 1, 32>}, {transform_indices = @transform_10, window_bounds = array<i64: 1, 8, 32>}, {transform_indices = @transform_11, window_bounds = array<i64: 1, 4, 8, 8>}]} {
    %c0 = arith.constant 0 : index
    %c0_0 = arith.constant 0 : index
    %c0_1 = arith.constant 0 : index
    %0 = vector.load %arg1[%c0, %c0_0, %c0_1] : memref<1x8x32xbf16, #tpu.memory_space<vmem>>, vector<1x8x32xbf16>
    %1 = vector.shape_cast %0 : vector<1x8x32xbf16> to vector<8x32xbf16>
    %c0_2 = arith.constant 0 : index
    %c0_3 = arith.constant 0 : index
    %c0_4 = arith.constant 0 : index
    %2 = vector.load %arg2[%c0_2, %c0_3, %c0_4] : memref<1x8x32xbf16, #tpu.memory_space<vmem>>, vector<1x8x32xbf16>
    %3 = vector.shape_cast %2 : vector<1x8x32xbf16> to vector<8x32xbf16>
    %4 = vector.shape_cast %1 : vector<8x32xbf16> to vector<1x8x32xbf16>
    %5 = vector.shape_cast %4 : vector<1x8x32xbf16> to vector<1x8x32xbf16>
    %6 = vector.broadcast %5 : vector<1x8x32xbf16> to vector<4x8x32xbf16>
    %7 = vector.shape_cast %3 : vector<8x32xbf16> to vector<1x8x32xbf16>
    %8 = vector.shape_cast %7 : vector<1x8x32xbf16> to vector<1x8x32xbf16>
    %9 = vector.broadcast %8 : vector<1x8x32xbf16> to vector<4x8x32xbf16>
    %c0_5 = arith.constant 0 : index
    %c0_6 = arith.constant 0 : index
    %c0_7 = arith.constant 0 : index
    %10 = vector.load %arg3[%c0_5, %c0_6, %c0_7] : memref<4x32x8xbf16, #tpu.memory_space<vmem>>, vector<4x32x8xbf16>
    "tpu.trace_start"() <{level = 10 : i32, message = "hld,hdk->hlk"}> : () -> ()
    %cst = arith.constant dense<0.000000e+00> : vector<4x8x8xf32>
    %11 = tpu.matmul %6, %10, %cst {dimension_numbers = #tpu.dot_dimension_numbers<[2], [1], [1], [2], [0, 0, 0, 1, 1, 2], [0], [0]>} : vector<4x8x32xbf16>, vector<4x32x8xbf16>, vector<4x8x8xf32> -> vector<4x8x8xf32>
    "tpu.trace_stop"() : () -> ()
    %c0_8 = arith.constant 0 : index
    %c0_9 = arith.constant 0 : index
    %c0_10 = arith.constant 0 : index
    %12 = vector.load %arg4[%c0_8, %c0_9, %c0_10] : memref<4x1x8xf32, #tpu.memory_space<vmem>>, vector<4x1x8xf32>
    %13 = vector.broadcast %12 : vector<4x1x8xf32> to vector<4x8x8xf32>
    %14 = arith.addf %11, %13 : vector<4x8x8xf32>
    %c0_11 = arith.constant 0 : index
    %c0_12 = arith.constant 0 : index
    %c0_13 = arith.constant 0 : index
    %15 = vector.load %arg5[%c0_11, %c0_12, %c0_13] : memref<4x32x8xbf16, #tpu.memory_space<vmem>>, vector<4x32x8xbf16>
    "tpu.trace_start"() <{level = 10 : i32, message = "hld,hdk->hlk"}> : () -> ()
    %cst_14 = arith.constant dense<0.000000e+00> : vector<4x8x8xf32>
    %16 = tpu.matmul %6, %15, %cst_14 {dimension_numbers = #tpu.dot_dimension_numbers<[2], [1], [1], [2], [0, 0, 0, 1, 1, 2], [0], [0]>} : vector<4x8x32xbf16>, vector<4x32x8xbf16>, vector<4x8x8xf32> -> vector<4x8x8xf32>
    "tpu.trace_stop"() : () -> ()
    %c0_15 = arith.constant 0 : index
    %c0_16 = arith.constant 0 : index
    %c0_17 = arith.constant 0 : index
    %17 = vector.load %arg6[%c0_15, %c0_16, %c0_17] : memref<4x1x8xf32, #tpu.memory_space<vmem>>, vector<4x1x8xf32>
    %18 = vector.broadcast %17 : vector<4x1x8xf32> to vector<4x8x8xf32>
    %19 = arith.addf %16, %18 : vector<4x8x8xf32>
    %c0_18 = arith.constant 0 : index
    %c0_19 = arith.constant 0 : index
    %c0_20 = arith.constant 0 : index
    %20 = vector.load %arg7[%c0_18, %c0_19, %c0_20] : memref<4x32x8xbf16, #tpu.memory_space<vmem>>, vector<4x32x8xbf16>
    "tpu.trace_start"() <{level = 10 : i32, message = "hld,hdk->hlk"}> : () -> ()
    %cst_21 = arith.constant dense<0.000000e+00> : vector<4x8x8xf32>
    %21 = tpu.matmul %9, %20, %cst_21 {dimension_numbers = #tpu.dot_dimension_numbers<[2], [1], [1], [2], [0, 0, 0, 1, 1, 2], [0], [0]>} : vector<4x8x32xbf16>, vector<4x32x8xbf16>, vector<4x8x8xf32> -> vector<4x8x8xf32>
    "tpu.trace_stop"() : () -> ()
    %c0_22 = arith.constant 0 : index
    %c0_23 = arith.constant 0 : index
    %c0_24 = arith.constant 0 : index
    %22 = vector.load %arg8[%c0_22, %c0_23, %c0_24] : memref<4x1x8xf32, #tpu.memory_space<vmem>>, vector<4x1x8xf32>
    %23 = vector.broadcast %22 : vector<4x1x8xf32> to vector<4x8x8xf32>
    %24 = arith.addf %21, %23 : vector<4x8x8xf32>
    %cst_25 = arith.constant 0.176776692 : f32
    %25 = vector.broadcast %cst_25 : f32 to vector<4x8x8xf32>
    %26 = arith.mulf %14, %25 : vector<4x8x8xf32>
    %27 = arith.truncf %26 : vector<4x8x8xf32> to vector<4x8x8xbf16>
    %28 = arith.truncf %19 : vector<4x8x8xf32> to vector<4x8x8xbf16>
    %29 = arith.truncf %24 : vector<4x8x8xf32> to vector<4x8x8xbf16>
    "tpu.trace_start"() <{level = 10 : i32, message = "hle,hse->hls"}> : () -> ()
    %cst_26 = arith.constant dense<0.000000e+00> : vector<4x8x8xf32>
    %30 = tpu.matmul %27, %28, %cst_26 {dimension_numbers = #tpu.dot_dimension_numbers<[2], [2], [1], [1], [0, 0, 0, 1, 1, 1], [0], [0]>} : vector<4x8x8xbf16>, vector<4x8x8xbf16>, vector<4x8x8xf32> -> vector<4x8x8xf32>
    "tpu.trace_stop"() : () -> ()
    %cst_27 = arith.constant dense<0xFF800000> : vector<4x8xf32>
    %31 = vector.multi_reduction <maximumf>, %30, %cst_27 [2] : vector<4x8x8xf32> to vector<4x8xf32>
    %32 = vector.shape_cast %31 : vector<4x8xf32> to vector<4x8x1xf32>
    %33 = vector.broadcast %32 : vector<4x8x1xf32> to vector<4x8x8xf32>
    %34 = arith.subf %30, %33 : vector<4x8x8xf32>
    %35 = math.exp %34 : vector<4x8x8xf32>
    %cst_28 = arith.constant dense<0.000000e+00> : vector<4x8xf32>
    %36 = vector.multi_reduction <add>, %35, %cst_28 [2] : vector<4x8x8xf32> to vector<4x8xf32>
    %37 = vector.shape_cast %36 : vector<4x8xf32> to vector<4x8x1xf32>
    %38 = tpu.reciprocal %37 {approx = true} : vector<4x8x1xf32> -> vector<4x8x1xf32>
    %39 = vector.broadcast %38 : vector<4x8x1xf32> to vector<4x8x8xf32>
    %40 = arith.mulf %35, %39 : vector<4x8x8xf32>
    %c0_29 = arith.constant 0 : index
    %c0_30 = arith.constant 0 : index
    %c0_31 = arith.constant 0 : index
    %c0_32 = arith.constant 0 : index
    %41 = vector.load %arg12[%c0_29, %c0_30, %c0_31, %c0_32] : memref<1x4x8x8xf32, #tpu.memory_space<vmem>>, vector<1x4x8x8xf32>
    %42 = vector.shape_cast %41 : vector<1x4x8x8xf32> to vector<4x8x8xf32>
    %43 = vector.shape_cast %40 : vector<4x8x8xf32> to vector<1x4x8x8xf32>
    tpu.vector_store %arg12[%c0_29, %c0_30, %c0_31, %c0_32], %43 {strides = array<i32>} : memref<1x4x8x8xf32, #tpu.memory_space<vmem>>, vector<1x4x8x8xf32>,
    %44 = arith.truncf %40 : vector<4x8x8xf32> to vector<4x8x8xbf16>
    "tpu.trace_start"() <{level = 10 : i32, message = "hls,hsd->hld"}> : () -> ()
    %cst_33 = arith.constant dense<0.000000e+00> : vector<4x8x8xf32>
    %45 = tpu.matmul %44, %29, %cst_33 {dimension_numbers = #tpu.dot_dimension_numbers<[2], [1], [1], [2], [0, 0, 0, 1, 1, 2], [0], [0]>} : vector<4x8x8xbf16>, vector<4x8x8xbf16>, vector<4x8x8xf32> -> vector<4x8x8xf32>
    "tpu.trace_stop"() : () -> ()
    %46 = arith.truncf %45 : vector<4x8x8xf32> to vector<4x8x8xbf16>
    %c0_34 = arith.constant 0 : index
    %c0_35 = arith.constant 0 : index
    %c0_36 = arith.constant 0 : index
    %47 = vector.load %arg9[%c0_34, %c0_35, %c0_36] : memref<4x8x32xbf16, #tpu.memory_space<vmem>>, vector<4x8x32xbf16>
    "tpu.trace_start"() <{level = 10 : i32, message = "hld,hdm->hlm"}> : () -> ()
    %cst_37 = arith.constant dense<0.000000e+00> : vector<4x8x32xf32>
    %48 = tpu.matmul %46, %47, %cst_37 {dimension_numbers = #tpu.dot_dimension_numbers<[2], [1], [1], [2], [0, 0, 0, 1, 1, 2], [0], [0]>} : vector<4x8x8xbf16>, vector<4x8x32xbf16>, vector<4x8x32xf32> -> vector<4x8x32xf32>
    "tpu.trace_stop"() : () -> ()
    %cst_38 = arith.constant dense<0.000000e+00> : vector<8x32xf32>
    %49 = vector.multi_reduction <add>, %48, %cst_38 [0] : vector<4x8x32xf32> to vector<8x32xf32>
    %c0_39 = arith.constant 0 : index
    %c0_40 = arith.constant 0 : index
    %50 = vector.load %arg10[%c0_39, %c0_40] : memref<1x32xf32, #tpu.memory_space<vmem>>, vector<1x32xf32>
    %51 = vector.broadcast %50 : vector<1x32xf32> to vector<8x32xf32>
    %52 = arith.addf %49, %51 : vector<8x32xf32>
    %c0_41 = arith.constant 0 : index
    %c0_42 = arith.constant 0 : index
    %c0_43 = arith.constant 0 : index
    %53 = vector.load %arg11[%c0_41, %c0_42, %c0_43] : memref<1x8x32xf32, #tpu.memory_space<vmem>>, vector<1x8x32xf32>
    %54 = vector.shape_cast %53 : vector<1x8x32xf32> to vector<8x32xf32>
    %55 = vector.shape_cast %52 : vector<8x32xf32> to vector<1x8x32xf32>
    tpu.vector_store %arg11[%c0_41, %c0_42, %c0_43], %55 {strides = array<i32>} : memref<1x8x32xf32, #tpu.memory_space<vmem>>, vector<1x8x32xf32>,
    return
  }
  func.func @transform_0(%arg0: i32) -> (i32, i32, i32) {
    %c0_i32 = arith.constant 0 : i32
    %c0_i32_0 = arith.constant 0 : i32
    %c0_i32_1 = arith.constant 0 : i32
    return %arg0, %c0_i32, %c0_i32_0 : i32, i32, i32
  }
  func.func @transform_1(%arg0: i32) -> (i32, i32, i32) {
    %c0_i32 = arith.constant 0 : i32
    %c0_i32_0 = arith.constant 0 : i32
    %c0_i32_1 = arith.constant 0 : i32
    return %arg0, %c0_i32, %c0_i32_0 : i32, i32, i32
  }
  func.func @transform_2(%arg0: i32) -> (i32, i32, i32) {
    %c0_i32 = arith.constant 0 : i32
    %c0_i32_0 = arith.constant 0 : i32
    %c0_i32_1 = arith.constant 0 : i32
    %c0_i32_2 = arith.constant 0 : i32
    return %c0_i32, %c0_i32_0, %c0_i32_1 : i32, i32, i32
  }
  func.func @transform_3(%arg0: i32) -> (i32, i32, i32) {
    %c0_i32 = arith.constant 0 : i32
    %c0_i32_0 = arith.constant 0 : i32
    %c0_i32_1 = arith.constant 0 : i32
    %c0_i32_2 = arith.constant 0 : i32
    return %c0_i32, %c0_i32_0, %c0_i32_1 : i32, i32, i32
  }
  func.func @transform_4(%arg0: i32) -> (i32, i32, i32) {
    %c0_i32 = arith.constant 0 : i32
    %c0_i32_0 = arith.constant 0 : i32
    %c0_i32_1 = arith.constant 0 : i32
    %c0_i32_2 = arith.constant 0 : i32
    return %c0_i32, %c0_i32_0, %c0_i32_1 : i32, i32, i32
  }
  func.func @transform_5(%arg0: i32) -> (i32, i32, i32) {
    %c0_i32 = arith.constant 0 : i32
    %c0_i32_0 = arith.constant 0 : i32
    %c0_i32_1 = arith.constant 0 : i32
    %c0_i32_2 = arith.constant 0 : i32
    return %c0_i32, %c0_i32_0, %c0_i32_1 : i32, i32, i32
  }
  func.func @transform_6(%arg0: i32) -> (i32, i32, i32) {
    %c0_i32 = arith.constant 0 : i32
    %c0_i32_0 = arith.constant 0 : i32
    %c0_i32_1 = arith.constant 0 : i32
    %c0_i32_2 = arith.constant 0 : i32
    return %c0_i32, %c0_i32_0, %c0_i32_1 : i32, i32, i32
  }
  func.func @transform_7(%arg0: i32) -> (i32, i32, i32) {
    %c0_i32 = arith.constant 0 : i32
    %c0_i32_0 = arith.constant 0 : i32
    %c0_i32_1 = arith.constant 0 : i32
    %c0_i32_2 = arith.constant 0 : i32
    return %c0_i32, %c0_i32_0, %c0_i32_1 : i32, i32, i32
  }
  func.func @transform_8(%arg0: i32) -> (i32, i32, i32) {
    %c0_i32 = arith.constant 0 : i32
    %c0_i32_0 = arith.constant 0 : i32
    %c0_i32_1 = arith.constant 0 : i32
    %c0_i32_2 = arith.constant 0 : i32
    return %c0_i32, %c0_i32_0, %c0_i32_1 : i32, i32, i32
  }
  func.func @transform_9(%arg0: i32) -> (i32, i32) {
    %c0_i32 = arith.constant 0 : i32
    %c0_i32_0 = arith.constant 0 : i32
    %c0_i32_1 = arith.constant 0 : i32
    return %c0_i32, %c0_i32_0 : i32, i32
  }
  func.func @transform_10(%arg0: i32) -> (i32, i32, i32) {
    %c0_i32 = arith.constant 0 : i32
    %c0_i32_0 = arith.constant 0 : i32
    %c0_i32_1 = arith.constant 0 : i32
    return %arg0, %c0_i32, %c0_i32_0 : i32, i32, i32
  }
  func.func @transform_11(%arg0: i32) -> (i32, i32, i32, i32) {
    %c0_i32 = arith.constant 0 : i32
    %c0_i32_0 = arith.constant 0 : i32
    %c0_i32_1 = arith.constant 0 : i32
    %c0_i32_2 = arith.constant 0 : i32
    return %arg0, %c0_i32, %c0_i32_0, %c0_i32_1 : i32, i32, i32, i32
  }
}

</mosaic_0001>

<llo_original>
// kernel: tpu_custom_call.1
$region0: #{tpu_custom_call.1}
  #allocation0 [shape = 'u32[]', space=smem, size = 0x4, offset = 0x4, fixed_abs, tag = 'smem constant byte address 0x4 - core index']
  #allocation1 [shape = 'u32[72,128]{1,0:T(1,128)}', space=vmem, size = 0x9000, scoped, tag = 'internal scratch']
  %s0 = inlined_call_operand.vmem [shape: bf16[2,8,32], index: 0, kind: input, shape index: {}]
  %s1 = inlined_call_operand.vmem [shape: bf16[2,8,32], index: 1, kind: input, shape index: {}]
  %s2 = inlined_call_operand.vmem [shape: bf16[4,32,8], index: 2, kind: input, shape index: {}]
  %s3 = inlined_call_operand.vmem [shape: f32[4,1,8], index: 3, kind: input, shape index: {}]
  %s4 = inlined_call_operand.vmem [shape: bf16[4,32,8], index: 4, kind: input, shape index: {}]
  %s5 = inlined_call_operand.vmem [shape: f32[4,1,8], index: 5, kind: input, shape index: {}]
  %s6 = inlined_call_operand.vmem [shape: bf16[4,32,8], index: 6, kind: input, shape index: {}]
  %s7 = inlined_call_operand.vmem [shape: f32[4,1,8], index: 7, kind: input, shape index: {}]
  %s8 = inlined_call_operand.vmem [shape: bf16[4,8,32], index: 8, kind: input, shape index: {}]
  %s9 = inlined_call_operand.vmem [shape: f32[1,32], index: 9, kind: input, shape index: {}]
  %s10 = inlined_call_operand.hbm [shape: f32[2,8,32], index: 10, kind: output, shape index: {0}]
  %s11 = inlined_call_operand.hbm [shape: f32[2,4,8,8], index: 11, kind: output, shape index: {1}]
  %12 = xla_tuple %s10, %s11
  %s13 = sld [smem:[#allocation0]]
  $region81: #{tpu_custom_call.1} parent=0
    _
  %s15 = ssub.s32 1, %s13
  %s16 = scalar_select 0, %s15, %s13
  $region1: #{tpu_custom_call.1} parent=0
    #allocation2 [shape = 'u8[8192]{0}', space=vmem, size = 0x2000, scoped, tag = 'output window, operand 0']
    #allocation3 [shape = 's32[2]{0}', space=sflag, size = 0x8, scoped, tag = 'scoped memory for tpu_custom_call.1']
    #allocation4 [shape = 'u8[32768]{0}', space=vmem, size = 0x8000, scoped, tag = 'output window, operand 1']
    #allocation5 [shape = 's32[2]{0}', space=sflag, size = 0x8, scoped, tag = 'scoped memory for tpu_custom_call.1']
    %17 = vsyncpa [#allocation3], 0
    %s18 = scalar_lea.sflag [#allocation3], 1
    %19 = vsyncpa %s18, 0
    %20 = vsyncpa [#allocation5], 0
    %s21 = scalar_lea.sflag [#allocation5], 1
    %22 = vsyncpa %s21, 0
    loop: start=0, step=1, limit=4
    $region2: #{tpu_custom_call.1} parent=1 // loop_pre_header
      _
    $region3: #{tpu_custom_call.1} parent=1 // loop_header
      %s24 = sphi 0, %s28
      %p25 = scmp.ge.s32.totalorder %s24, 4
      %s34 = sphi 0, %s36
      %s37 = sphi 0, %s34
      %s38 = sphi 0, %s37
      %s54 = sphi 0, %s38
      %s60 = sphi 0, %s62
      %s63 = sphi 0, %s60
      %s64 = sphi 0, %s63
      %s80 = sphi 0, %s64
      %s84 = sphi 0, %s84
      %s86 = sphi 0, %s84
      %s87 = sphi 0, %s86
      %s101 = sphi 0, %s87
      %s105 = sphi 0, %s105
      %s107 = sphi 0, %s105
      %s108 = sphi 0, %s107
      %s122 = sphi 0, %s108
      %s126 = sphi 0, %s126
      %s128 = sphi 0, %s126
      %s129 = sphi 0, %s128
      %s143 = sphi 0, %s129
      %s147 = sphi 0, %s147
      %s149 = sphi 0, %s147
      %s150 = sphi 0, %s149
      %s164 = sphi 0, %s150
      %s168 = sphi 0, %s168
      %s170 = sphi 0, %s168
      %s171 = sphi 0, %s170
      %s185 = sphi 0, %s171
      %s189 = sphi 0, %s189
      %s191 = sphi 0, %s189
      %s192 = sphi 0, %s191
      %s206 = sphi 0, %s192
      %s210 = sphi 0, %s210
      %s212 = sphi 0, %s210
      %s213 = sphi 0, %s212
      %s227 = sphi 0, %s213
      %s231 = sphi 0, %s231
      %s233 = sphi 0, %s231
      %s234 = sphi 0, %s233
      %s248 = sphi 0, %s234
      %s254 = sphi 0, %s256
      %s257 = sphi 0, %s254
      %s258 = sphi 0, %s257
      %s274 = sphi 0, %s258
      %s280 = sphi 0, %s282
      %s283 = sphi 0, %s280
      %s284 = sphi 0, %s283
      %s300 = sphi 0, %s284
    $region4: #{tpu_custom_call.1} parent=1 // loop_header_branch
      %27 = sbr.rel (%p25) target = $region8
    $region5: #{tpu_custom_call.1} parent=1 // loop_body
      %s29 = ssub.s32 %s24, 1
      %s30 = ssub.s32 %s24, 2
      %s31 = sadd.s32 %s24, 1
      %s32 = ssub.s32 %s24, %s31
      %p33 = scmp.eq.s32.totalorder %s32, 0
      %s35 = sadd.s32 %s34, 1
      %s36 = scalar_select %p33, %s34, %s35
      %p39 = pneg %p33
      %p40 = scmp.eq.s32.totalorder %s24, 1
      %p41 = por %p39, %p40
      %p42 = scmp.ne.s32.totalorder %s34, %s37
      %p43 = scmp.eq.s32.totalorder %s24, 0
      %p44 = por %p42, %p43
      %p45 = scmp.ne.s32.totalorder %s34, %s37
      %p46 = scmp.eq.s32.totalorder %s29, 1
      %p47 = por %p45, %p46
      %p48 = scmp.ne.s32.totalorder %s37, %s38
      %p49 = scmp.eq.s32.totalorder %s29, 0
      %p50 = por %p48, %p49
      %p51 = scmp.ne.s32.totalorder %s37, %s38
      %p52 = scmp.eq.s32.totalorder %s30, 1
      %p53 = por %p51, %p52
      %p55 = scmp.ne.s32.totalorder %s38, %s54
      %p56 = scmp.eq.s32.totalorder %s30, 0
      %p57 = por %p55, %p56
      %s58 = ssub.s32 %s24, %s31
      %p59 = scmp.eq.s32.totalorder %s58, 0
      %s61 = sadd.s32 %s60, 1
      %s62 = scalar_select %p59, %s60, %s61
      %p65 = pneg %p59
      %p66 = scmp.eq.s32.totalorder %s24, 1
      %p67 = por %p65, %p66
      %p68 = scmp.ne.s32.totalorder %s60, %s63
      %p69 = scmp.eq.s32.totalorder %s24, 0
      %p70 = por %p68, %p69
      %p71 = scmp.ne.s32.totalorder %s60, %s63
      %p72 = scmp.eq.s32.totalorder %s29, 1
      %p73 = por %p71, %p72
      %p74 = scmp.ne.s32.totalorder %s63, %s64
      %p75 = scmp.eq.s32.totalorder %s29, 0
      %p76 = por %p74, %p75
      %p77 = scmp.ne.s32.totalorder %s63, %s64
      %p78 = scmp.eq.s32.totalorder %s30, 1
      %p79 = por %p77, %p78
      %p81 = scmp.ne.s32.totalorder %s64, %s80
      %p82 = scmp.eq.s32.totalorder %s30, 0
      %p83 = por %p81, %p82
      %s85 = sadd.s32 %s84, 1
      %p88 = scmp.eq.s32.totalorder %s24, 1
      %p89 = scmp.ne.s32.totalorder %s84, %s86
      %p90 = scmp.eq.s32.totalorder %s24, 0
      %p91 = por %p89, %p90
      %p92 = scmp.ne.s32.totalorder %s84, %s86
      %p93 = scmp.eq.s32.totalorder %s29, 1
      %p94 = por %p92, %p93
      %p95 = scmp.ne.s32.totalorder %s86, %s87
      %p96 = scmp.eq.s32.totalorder %s29, 0
      %p97 = por %p95, %p96
      %p98 = scmp.ne.s32.totalorder %s86, %s87
      %p99 = scmp.eq.s32.totalorder %s30, 1
      %p100 = por %p98, %p99
      %p102 = scmp.ne.s32.totalorder %s87, %s101
      %p103 = scmp.eq.s32.totalorder %s30, 0
      %p104 = por %p102, %p103
      %s106 = sadd.s32 %s105, 1
      %p109 = scmp.eq.s32.totalorder %s24, 1
      %p110 = scmp.ne.s32.totalorder %s105, %s107
      %p111 = scmp.eq.s32.totalorder %s24, 0
      %p112 = por %p110, %p111
      %p113 = scmp.ne.s32.totalorder %s105, %s107
      %p114 = scmp.eq.s32.totalorder %s29, 1
      %p115 = por %p113, %p114
      %p116 = scmp.ne.s32.totalorder %s107, %s108
      %p117 = scmp.eq.s32.totalorder %s29, 0
      %p118 = por %p116, %p117
      %p119 = scmp.ne.s32.totalorder %s107, %s108
      %p120 = scmp.eq.s32.totalorder %s30, 1
      %p121 = por %p119, %p120
      %p123 = scmp.ne.s32.totalorder %s108, %s122
      %p124 = scmp.eq.s32.totalorder %s30, 0
      %p125 = por %p123, %p124
      %s127 = sadd.s32 %s126, 1
      %p130 = scmp.eq.s32.totalorder %s24, 1
      %p131 = scmp.ne.s32.totalorder %s126, %s128
      %p132 = scmp.eq.s32.totalorder %s24, 0
      %p133 = por %p131, %p132
      %p134 = scmp.ne.s32.totalorder %s126, %s128
      %p135 = scmp.eq.s32.totalorder %s29, 1
      %p136 = por %p134, %p135
      %p137 = scmp.ne.s32.totalorder %s128, %s129
      %p138 = scmp.eq.s32.totalorder %s29, 0
      %p139 = por %p137, %p138
      %p140 = scmp.ne.s32.totalorder %s128, %s129
      %p141 = scmp.eq.s32.totalorder %s30, 1
      %p142 = por %p140, %p141
      %p144 = scmp.ne.s32.totalorder %s129, %s143
      %p145 = scmp.eq.s32.totalorder %s30, 0
      %p146 = por %p144, %p145
      %s148 = sadd.s32 %s147, 1
      %p151 = scmp.eq.s32.totalorder %s24, 1
      %p152 = scmp.ne.s32.totalorder %s147, %s149
      %p153 = scmp.eq.s32.totalorder %s24, 0
      %p154 = por %p152, %p153
      %p155 = scmp.ne.s32.totalorder %s147, %s149
      %p156 = scmp.eq.s32.totalorder %s29, 1
      %p157 = por %p155, %p156
      %p158 = scmp.ne.s32.totalorder %s149, %s150
      %p159 = scmp.eq.s32.totalorder %s29, 0
      %p160 = por %p158, %p159
      %p161 = scmp.ne.s32.totalorder %s149, %s150
      %p162 = scmp.eq.s32.totalorder %s30, 1
      %p163 = por %p161, %p162
      %p165 = scmp.ne.s32.totalorder %s150, %s164
      %p166 = scmp.eq.s32.totalorder %s30, 0
      %p167 = por %p165, %p166
      %s169 = sadd.s32 %s168, 1
      %p172 = scmp.eq.s32.totalorder %s24, 1
      %p173 = scmp.ne.s32.totalorder %s168, %s170
      %p174 = scmp.eq.s32.totalorder %s24, 0
      %p175 = por %p173, %p174
      %p176 = scmp.ne.s32.totalorder %s168, %s170
      %p177 = scmp.eq.s32.totalorder %s29, 1
      %p178 = por %p176, %p177
      %p179 = scmp.ne.s32.totalorder %s170, %s171
      %p180 = scmp.eq.s32.totalorder %s29, 0
      %p181 = por %p179, %p180
      %p182 = scmp.ne.s32.totalorder %s170, %s171
      %p183 = scmp.eq.s32.totalorder %s30, 1
      %p184 = por %p182, %p183
      %p186 = scmp.ne.s32.totalorder %s171, %s185
      %p187 = scmp.eq.s32.totalorder %s30, 0
      %p188 = por %p186, %p187
      %s190 = sadd.s32 %s189, 1
      %p193 = scmp.eq.s32.totalorder %s24, 1
      %p194 = scmp.ne.s32.totalorder %s189, %s191
      %p195 = scmp.eq.s32.totalorder %s24, 0
      %p196 = por %p194, %p195
      %p197 = scmp.ne.s32.totalorder %s189, %s191
      %p198 = scmp.eq.s32.totalorder %s29, 1
      %p199 = por %p197, %p198
      %p200 = scmp.ne.s32.totalorder %s191, %s192
      %p201 = scmp.eq.s32.totalorder %s29, 0
      %p202 = por %p200, %p201
      %p203 = scmp.ne.s32.totalorder %s191, %s192
      %p204 = scmp.eq.s32.totalorder %s30, 1
      %p205 = por %p203, %p204
      %p207 = scmp.ne.s32.totalorder %s192, %s206
      %p208 = scmp.eq.s32.totalorder %s30, 0
      %p209 = por %p207, %p208
      %s211 = sadd.s32 %s210, 1
      %p214 = scmp.eq.s32.totalorder %s24, 1
      %p215 = scmp.ne.s32.totalorder %s210, %s212
      %p216 = scmp.eq.s32.totalorder %s24, 0
      %p217 = por %p215, %p216
      %p218 = scmp.ne.s32.totalorder %s210, %s212
      %p219 = scmp.eq.s32.totalorder %s29, 1
      %p220 = por %p218, %p219
      %p221 = scmp.ne.s32.totalorder %s212, %s213
      %p222 = scmp.eq.s32.totalorder %s29, 0
      %p223 = por %p221, %p222
      %p224 = scmp.ne.s32.totalorder %s212, %s213
      %p225 = scmp.eq.s32.totalorder %s30, 1
      %p226 = por %p224, %p225
      %p228 = scmp.ne.s32.totalorder %s213, %s227
      %p229 = scmp.eq.s32.totalorder %s30, 0
      %p230 = por %p228, %p229
      %s232 = sadd.s32 %s231, 1
      %p235 = scmp.eq.s32.totalorder %s24, 1
      %p236 = scmp.ne.s32.totalorder %s231, %s233
      %p237 = scmp.eq.s32.totalorder %s24, 0
      %p238 = por %p236, %p237
      %p239 = scmp.ne.s32.totalorder %s231, %s233
      %p240 = scmp.eq.s32.totalorder %s29, 1
      %p241 = por %p239, %p240
      %p242 = scmp.ne.s32.totalorder %s233, %s234
      %p243 = scmp.eq.s32.totalorder %s29, 0
      %p244 = por %p242, %p243
      %p245 = scmp.ne.s32.totalorder %s233, %s234
      %p246 = scmp.eq.s32.totalorder %s30, 1
      %p247 = por %p245, %p246
      %p249 = scmp.ne.s32.totalorder %s234, %s248
      %p250 = scmp.eq.s32.totalorder %s30, 0
      %p251 = por %p249, %p250
      %s252 = ssub.s32 %s24, %s31
      %p253 = scmp.eq.s32.totalorder %s252, 0
      %s255 = sadd.s32 %s254, 1
      %s256 = scalar_select %p253, %s254, %s255
      %p259 = pneg %p253
      %p260 = scmp.eq.s32.totalorder %s24, 1
      %p261 = por %p259, %p260
      %p262 = scmp.ne.s32.totalorder %s254, %s257
      %p263 = scmp.eq.s32.totalorder %s24, 0
      %p264 = por %p262, %p263
      %p265 = scmp.ne.s32.totalorder %s254, %s257
      %p266 = scmp.eq.s32.totalorder %s29, 1
      %p267 = por %p265, %p266
      %p268 = scmp.ne.s32.totalorder %s257, %s258
      %p269 = scmp.eq.s32.totalorder %s29, 0
      %p270 = por %p268, %p269
      %p271 = scmp.ne.s32.totalorder %s257, %s258
      %p272 = scmp.eq.s32.totalorder %s30, 1
      %p273 = por %p271, %p272
      %p275 = scmp.ne.s32.totalorder %s258, %s274
      %p276 = scmp.eq.s32.totalorder %s30, 0
      %p277 = por %p275, %p276
      %s278 = ssub.s32 %s24, %s31
      %p279 = scmp.eq.s32.totalorder %s278, 0
      %s281 = sadd.s32 %s280, 1
      %s282 = scalar_select %p279, %s280, %s281
      %p285 = pneg %p279
      %p286 = scmp.eq.s32.totalorder %s24, 1
      %p287 = por %p285, %p286
      %p288 = scmp.ne.s32.totalorder %s280, %s283
      %p289 = scmp.eq.s32.totalorder %s24, 0
      %p290 = por %p288, %p289
      %p291 = scmp.ne.s32.totalorder %s280, %s283
      %p292 = scmp.eq.s32.totalorder %s29, 1
      %p293 = por %p291, %p292
      %p294 = scmp.ne.s32.totalorder %s283, %s284
      %p295 = scmp.eq.s32.totalorder %s29, 0
      %p296 = por %p294, %p295
      %p297 = scmp.ne.s32.totalorder %s283, %s284
      %p298 = scmp.eq.s32.totalorder %s30, 1
      %p299 = por %p297, %p298
      %p301 = scmp.ne.s32.totalorder %s284, %s300
      %p302 = scmp.eq.s32.totalorder %s30, 0
      %p303 = por %p301, %p302
      %p304 = scmp.le.s32.totalorder 1, %s24
      %p305 = scmp.lt.s32.totalorder %s24, 3
      %p306 = pnand %p304, %p305
      %p307 = pneg %p306
      // Predicated region
      $region9: #{tpu_custom_call.1} parent=5 // pred_check
        _
      $region10: #{tpu_custom_call.1} parent=5 // pred_check_branch
        %309 = sbr.rel (%p306) target = $region12
      $region11: #{tpu_custom_call.1} parent=5 // pred_region
        %s310 = ssub.s32 %s24, 1
        // Predicated region
        $region13: #{tpu_custom_call.1} parent=11 // pred_check
          %p311 = pneg %p97
        $region14: #{tpu_custom_call.1} parent=11 // pred_check_branch
          %313 = sbr.rel (%p311) target = $region16
        $region15: #{tpu_custom_call.1} parent=11 // pred_region
          _
        $region16: #{tpu_custom_call.1} parent=11 // pred_fallthru
          _
        // Predicated region
        $region17: #{tpu_custom_call.1} parent=11 // pred_check
          %p314 = pneg %p118
        $region18: #{tpu_custom_call.1} parent=11 // pred_check_branch
          %316 = sbr.rel (%p314) target = $region20
        $region19: #{tpu_custom_call.1} parent=11 // pred_region
          _
        $region20: #{tpu_custom_call.1} parent=11 // pred_fallthru
          _
        // Predicated region
        $region21: #{tpu_custom_call.1} parent=11 // pred_check
          %p317 = pneg %p139
        $region22: #{tpu_custom_call.1} parent=11 // pred_check_branch
          %319 = sbr.rel (%p317) target = $region24
        $region23: #{tpu_custom_call.1} parent=11 // pred_region
          _
        $region24: #{tpu_custom_call.1} parent=11 // pred_fallthru
          _
        // Predicated region
        $region25: #{tpu_custom_call.1} parent=11 // pred_check
          %p320 = pneg %p160
        $region26: #{tpu_custom_call.1} parent=11 // pred_check_branch
          %322 = sbr.rel (%p320) target = $region28
        $region27: #{tpu_custom_call.1} parent=11 // pred_region
          _
        $region28: #{tpu_custom_call.1} parent=11 // pred_fallthru
          _
        // Predicated region
        $region29: #{tpu_custom_call.1} parent=11 // pred_check
          %p323 = pneg %p181
        $region30: #{tpu_custom_call.1} parent=11 // pred_check_branch
          %325 = sbr.rel (%p323) target = $region32
        $region31: #{tpu_custom_call.1} parent=11 // pred_region
          _
        $region32: #{tpu_custom_call.1} parent=11 // pred_fallthru
          _
        // Predicated region
        $region33: #{tpu_custom_call.1} parent=11 // pred_check
          %p326 = pneg %p202
        $region34: #{tpu_custom_call.1} parent=11 // pred_check_branch
          %328 = sbr.rel (%p326) target = $region36
        $region35: #{tpu_custom_call.1} parent=11 // pred_region
          _
        $region36: #{tpu_custom_call.1} parent=11 // pred_fallthru
          _
        // Predicated region
        $region37: #{tpu_custom_call.1} parent=11 // pred_check
          %p329 = pneg %p223
        $region38: #{tpu_custom_call.1} parent=11 // pred_check_branch
          %331 = sbr.rel (%p329) target = $region40
        $region39: #{tpu_custom_call.1} parent=11 // pred_region
          _
        $region40: #{tpu_custom_call.1} parent=11 // pred_fallthru
          _
        // Predicated region
        $region41: #{tpu_custom_call.1} parent=11 // pred_check
          %p332 = pneg %p244
        $region42: #{tpu_custom_call.1} parent=11 // pred_check_branch
          %334 = sbr.rel (%p332) target = $region44
        $region43: #{tpu_custom_call.1} parent=11 // pred_region
          _
        $region44: #{tpu_custom_call.1} parent=11 // pred_fallthru
          _
      $region12: #{tpu_custom_call.1} parent=5 // pred_fallthru
        _
      %p335 = scmp.lt.s32.totalorder %s24, 2
      // Predicated region
      $region45: #{tpu_custom_call.1} parent=5 // pred_check
        %p336 = pneg %p335
      $region46: #{tpu_custom_call.1} parent=5 // pred_check_branch
        %338 = sbr.rel (%p336) target = $region48
      $region47: #{tpu_custom_call.1} parent=5 // pred_region
        // Predicated region
        $region49: #{tpu_custom_call.1} parent=47 // pred_check
          %p339 = pneg %p44
        $region50: #{tpu_custom_call.1} parent=47 // pred_check_branch
          %341 = sbr.rel (%p339) target = $region52
        $region51: #{tpu_custom_call.1} parent=47 // pred_region
          %p342 = scmp.lt.s32.totalorder %s24, 1
          %s343 = scalar_select %p342, %s24, 1
          %s344 = smul.addr %s343, 4
          %s345 = scalar_lea.vmem %s0, %s344
        $region52: #{tpu_custom_call.1} parent=47 // pred_fallthru
          _
        // Predicated region
        $region53: #{tpu_custom_call.1} parent=47 // pred_check
          %p346 = pneg %p70
        $region54: #{tpu_custom_call.1} parent=47 // pred_check_branch
          %348 = sbr.rel (%p346) target = $region56
        $region55: #{tpu_custom_call.1} parent=47 // pred_region
          %p349 = scmp.lt.s32.totalorder %s24, 1
          %s350 = scalar_select %p349, %s24, 1
          %s351 = smul.addr %s350, 4
          %s352 = scalar_lea.vmem %s1, %s351
        $region56: #{tpu_custom_call.1} parent=47 // pred_fallthru
          _
      $region48: #{tpu_custom_call.1} parent=5 // pred_fallthru
        _
      %p353 = scmp.le.s32.totalorder 1, %s24
      %p354 = scmp.lt.s32.totalorder %s24, 3
      %p355 = pnand %p353, %p354
      %p356 = pneg %p355
      // Predicated region
      $region57: #{tpu_custom_call.1} parent=5 // pred_check
        _
      $region58: #{tpu_custom_call.1} parent=5 // pred_check_branch
        %358 = sbr.rel (%p355) target = $region60
      $region59: #{tpu_custom_call.1} parent=5 // pred_region
        %s359 = ssub.s32 %s24, 1
        %p360 = scmp.lt.s32.totalorder %s29, 1
        %s361 = scalar_select %p360, %s29, 1
        %s362 = smul.addr %s361, 4
        %s363 = scalar_lea.vmem %s0, %s362
        %p364 = pneg %p50
        %p365 = pneg %p47
        %p366 = scmp.lt.s32.totalorder %s29, 1
        %s367 = scalar_select %p366, %s29, 1
        %s368 = smul.addr %s367, 4
        %s369 = scalar_lea.vmem %s1, %s368
        %p370 = pneg %p76
        %p371 = pneg %p73
        %p372 = pneg %p97
        %p373 = pneg %p94
        %p374 = pneg %p118
        %p375 = pneg %p115
        %p376 = pneg %p139
        %p377 = pneg %p136
        %p378 = pneg %p160
        %p379 = pneg %p157
        %p380 = pneg %p181
        %p381 = pneg %p178
        %p382 = pneg %p202
        %p383 = pneg %p199
        %p384 = pneg %p223
        %p385 = pneg %p220
        %p386 = pneg %p244
        %p387 = pneg %p241
        %p388 = pneg %p270
        %p389 = pneg %p267
        %s390 = sand.u32 %s257, 1
        %s391 = scalar_lea.sflag [#allocation3], %s390
        %s392 = sand.u32 %s257, 1
        %s393 = smul.addr %s392, 8
        %s394 = scalar_lea.vmem [#allocation2], %s393
        %p395 = pneg %p296
        %p396 = pneg %p293
        %s397 = sand.u32 %s283, 1
        %s398 = scalar_lea.sflag [#allocation5], %s397
        %s399 = sand.u32 %s283, 1
        %s400 = smul.addr %s399, 32
        %s401 = scalar_lea.vmem [#allocation4], %s400
        %p402 = scmp.lt.s32.totalorder %s29, 1
        %s403 = scalar_select %p402, %s29, 1
        %s404 = smul.addr %s403, 4
        %s405 = scalar_lea.vmem %s0, %s404
        %p406 = scmp.lt.s32.totalorder %s29, 1
        %s407 = scalar_select %p406, %s29, 1
        %s408 = smul.addr %s407, 4
        %s409 = scalar_lea.vmem %s1, %s408
        %v411 = vld [vmem:[%s405] sm:$0xf]
        %v412 = vld [vmem:[%s409] sm:$0xf]
        %v413 = vld [vmem:[%s2] sm:$0xf]
        %v414 = vld [vmem:[%s2 + $0x4] sm:$0xf]
        %v415 = vld [vmem:[%s2 + $0x8] sm:$0xf]
        %v416 = vld [vmem:[%s2 + $0xc] sm:$0xf]
        %v417 = vld [vmem:[%s2 + $0x10] sm:$0xf]
        %v418 = vld [vmem:[%s2 + $0x14] sm:$0xf]
        %v419 = vld [vmem:[%s2 + $0x18] sm:$0xf]
        %v420 = vld [vmem:[%s2 + $0x1c] sm:$0xf]
        %v421 = vld [vmem:[%s2 + $0x20] sm:$0xf]
        %v422 = vld [vmem:[%s2 + $0x24] sm:$0xf]
        %v423 = vld [vmem:[%s2 + $0x28] sm:$0xf]
        %v424 = vld [vmem:[%s2 + $0x2c] sm:$0xf]
        %v425 = vld [vmem:[%s2 + $0x30] sm:$0xf]
        %v426 = vld [vmem:[%s2 + $0x34] sm:$0xf]
        %v427 = vld [vmem:[%s2 + $0x38] sm:$0xf]
        %v428 = vld [vmem:[%s2 + $0x3c] sm:$0xf]
        %v429 = vld [vmem:[%s3] sm:$0x1]
        %v430 = vld [vmem:[%s3 + $0x1] sm:$0x1]
        %v431 = vld [vmem:[%s3 + $0x2] sm:$0x1]
        %v432 = vld [vmem:[%s3 + $0x3] sm:$0x1]
        %v437 = vperm.slane %v429, 0
        %v438 = vperm.slane %v430, 0
        %v439 = vperm.slane %v431, 0
        %v440 = vperm.slane %v432, 0
        %v449 = vunpack.c.l.b16 %v413
        %v450 = vunpack.c.l.b16 %v414
        %v451 = vunpack.c.l.b16 %v415
        %v452 = vunpack.c.l.b16 %v416
        %v453 = vpack.c.b16 %v450, %v449
        %v454 = vpack.c.b16 %v452, %v451
        %vm457 = vcmask 261120
        %v459 = vsel %vm457, %v411, 0
        %461 = vmatpush.bf16.msra.mxu0 0
        %462 = vmatpush.bf16.msra.mxu0 0
        %463 = vmatpush.bf16.msra.mxu0 0
        %464 = vmatpush.bf16.msra.mxu0 0
        %465 = vmatpush.bf16.msra.mxu0 0
        %466 = vmatpush.bf16.msra.mxu0 0
        %467 = vmatpush.bf16.msra.mxu0 %v454
        %468 = vmatpush.bf16.msra.mxu0 %v453
        %469 = vmatmul.bf16.gmra.mxu0 %v459
        %v470 = vpop.f32.mrf.mxu0
        %v471 = vadd.f32 %v437, %v470
        %v472 = vpop.f32.mrf.mxu0
        %473 = vdwg.mxu0
        %v478 = vunpack.c.l.b16 %v417
        %v479 = vunpack.c.l.b16 %v418
        %v480 = vunpack.c.l.b16 %v419
        %v481 = vunpack.c.l.b16 %v420
        %v482 = vpack.c.b16 %v479, %v478
        %v483 = vpack.c.b16 %v481, %v480
        %486 = vmatpush.bf16.msra.mxu0 0
        %487 = vmatpush.bf16.msra.mxu0 0
        %488 = vmatpush.bf16.msra.mxu0 0
        %489 = vmatpush.bf16.msra.mxu0 0
        %490 = vmatpush.bf16.msra.mxu0 0
        %491 = vmatpush.bf16.msra.mxu0 0
        %492 = vmatpush.bf16.msra.mxu0 %v483
        %493 = vmatpush.bf16.msra.mxu0 %v482
        %494 = vmatmul.bf16.gmra.mxu0 %v459
        %v495 = vpop.f32.mrf.mxu0
        %v496 = vadd.f32 %v438, %v495
        %v497 = vpop.f32.mrf.mxu0
        %498 = vdwg.mxu0
        %v503 = vunpack.c.l.b16 %v421
        %v504 = vunpack.c.l.b16 %v422
        %v505 = vunpack.c.l.b16 %v423
        %v506 = vunpack.c.l.b16 %v424
        %v507 = vpack.c.b16 %v504, %v503
        %v508 = vpack.c.b16 %v506, %v505
        %511 = vmatpush.bf16.msra.mxu0 0
        %512 = vmatpush.bf16.msra.mxu0 0
        %513 = vmatpush.bf16.msra.mxu0 0
        %514 = vmatpush.bf16.msra.mxu0 0
        %515 = vmatpush.bf16.msra.mxu0 0
        %516 = vmatpush.bf16.msra.mxu0 0
        %517 = vmatpush.bf16.msra.mxu0 %v508
        %518 = vmatpush.bf16.msra.mxu0 %v507
        %519 = vmatmul.bf16.gmra.mxu0 %v459
        %v520 = vpop.f32.mrf.mxu0
        %v521 = vadd.f32 %v439, %v520
        %v522 = vpop.f32.mrf.mxu0
        %523 = vdwg.mxu0
        %v528 = vunpack.c.l.b16 %v425
        %v529 = vunpack.c.l.b16 %v426
        %v530 = vunpack.c.l.b16 %v427
        %v531 = vunpack.c.l.b16 %v428
        %v532 = vpack.c.b16 %v529, %v528
        %v533 = vpack.c.b16 %v531, %v530
        %536 = vmatpush.bf16.msra.mxu0 0
        %537 = vmatpush.bf16.msra.mxu0 0
        %538 = vmatpush.bf16.msra.mxu0 0
        %539 = vmatpush.bf16.msra.mxu0 0
        %540 = vmatpush.bf16.msra.mxu0 0
        %541 = vmatpush.bf16.msra.mxu0 0
        %542 = vmatpush.bf16.msra.mxu0 %v533
        %543 = vmatpush.bf16.msra.mxu0 %v532
        %544 = vmatmul.bf16.gmra.mxu0 %v459
        %v545 = vpop.f32.mrf.mxu0
        %v546 = vadd.f32 %v440, %v545
        %v547 = vpop.f32.mrf.mxu0
        %548 = vdwg.mxu0
        %v549 = vld [vmem:[%s4] sm:$0xf]
        %v550 = vld [vmem:[%s4 + $0x4] sm:$0xf]
        %v551 = vld [vmem:[%s4 + $0x8] sm:$0xf]
        %v552 = vld [vmem:[%s4 + $0xc] sm:$0xf]
        %v553 = vld [vmem:[%s4 + $0x10] sm:$0xf]
        %v554 = vld [vmem:[%s4 + $0x14] sm:$0xf]
        %v555 = vld [vmem:[%s4 + $0x18] sm:$0xf]
        %v556 = vld [vmem:[%s4 + $0x1c] sm:$0xf]
        %v557 = vld [vmem:[%s4 + $0x20] sm:$0xf]
        %v558 = vld [vmem:[%s4 + $0x24] sm:$0xf]
        %v559 = vld [vmem:[%s4 + $0x28] sm:$0xf]
        %v560 = vld [vmem:[%s4 + $0x2c] sm:$0xf]
        %v561 = vld [vmem:[%s4 + $0x30] sm:$0xf]
        %v562 = vld [vmem:[%s4 + $0x34] sm:$0xf]
        %v563 = vld [vmem:[%s4 + $0x38] sm:$0xf]
        %v564 = vld [vmem:[%s4 + $0x3c] sm:$0xf]
        %v565 = vld [vmem:[%s5] sm:$0x1]
        %v566 = vld [vmem:[%s5 + $0x1] sm:$0x1]
        %v567 = vld [vmem:[%s5 + $0x2] sm:$0x1]
        %v568 = vld [vmem:[%s5 + $0x3] sm:$0x1]
        %v573 = vperm.slane %v565, 0
        %v574 = vperm.slane %v566, 0
        %v575 = vperm.slane %v567, 0
        %v576 = vperm.slane %v568, 0
        %v585 = vunpack.c.l.b16 %v549
        %v586 = vunpack.c.l.b16 %v550
        %v587 = vunpack.c.l.b16 %v551
        %v588 = vunpack.c.l.b16 %v552
        %v589 = vpack.c.b16 %v586, %v585
        %v590 = vpack.c.b16 %v588, %v587
        %593 = vmatpush.bf16.msra.mxu0 0
        %594 = vmatpush.bf16.msra.mxu0 0
        %595 = vmatpush.bf16.msra.mxu0 0
        %596 = vmatpush.bf16.msra.mxu0 0
        %597 = vmatpush.bf16.msra.mxu0 0
        %598 = vmatpush.bf16.msra.mxu0 0
        %599 = vmatpush.bf16.msra.mxu0 %v590
        %600 = vmatpush.bf16.msra.mxu0 %v589
        %601 = vmatmul.bf16.gmra.mxu0 %v459
        %v602 = vpop.f32.mrf.mxu0
        %v603 = vadd.f32 %v573, %v602
        %v604 = vpop.f32.mrf.mxu0
        %605 = vdwg.mxu0
        %v610 = vunpack.c.l.b16 %v553
        %v611 = vunpack.c.l.b16 %v554
        %v612 = vunpack.c.l.b16 %v555
        %v613 = vunpack.c.l.b16 %v556
        %v614 = vpack.c.b16 %v611, %v610
        %v615 = vpack.c.b16 %v613, %v612
        %618 = vmatpush.bf16.msra.mxu0 0
        %619 = vmatpush.bf16.msra.mxu0 0
        %620 = vmatpush.bf16.msra.mxu0 0
        %621 = vmatpush.bf16.msra.mxu0 0
        %622 = vmatpush.bf16.msra.mxu0 0
        %623 = vmatpush.bf16.msra.mxu0 0
        %624 = vmatpush.bf16.msra.mxu0 %v615
        %625 = vmatpush.bf16.msra.mxu0 %v614
        %626 = vmatmul.bf16.gmra.mxu0 %v459
        %v627 = vpop.f32.mrf.mxu0
        %v628 = vadd.f32 %v574, %v627
        %v629 = vpop.f32.mrf.mxu0
        %630 = vdwg.mxu0
        %v635 = vunpack.c.l.b16 %v557
        %v636 = vunpack.c.l.b16 %v558
        %v637 = vunpack.c.l.b16 %v559
        %v638 = vunpack.c.l.b16 %v560
        %v639 = vpack.c.b16 %v636, %v635
        %v640 = vpack.c.b16 %v638, %v637
        %643 = vmatpush.bf16.msra.mxu0 0
        %644 = vmatpush.bf16.msra.mxu0 0
        %645 = vmatpush.bf16.msra.mxu0 0
        %646 = vmatpush.bf16.msra.mxu0 0
        %647 = vmatpush.bf16.msra.mxu0 0
        %648 = vmatpush.bf16.msra.mxu0 0
        %649 = vmatpush.bf16.msra.mxu0 %v640
        %650 = vmatpush.bf16.msra.mxu0 %v639
        %651 = vmatmul.bf16.gmra.mxu0 %v459
        %v652 = vpop.f32.mrf.mxu0
        %v653 = vadd.f32 %v575, %v652
        %v654 = vpop.f32.mrf.mxu0
        %655 = vdwg.mxu0
        %v660 = vunpack.c.l.b16 %v561
        %v661 = vunpack.c.l.b16 %v562
        %v662 = vunpack.c.l.b16 %v563
        %v663 = vunpack.c.l.b16 %v564
        %v664 = vpack.c.b16 %v661, %v660
        %v665 = vpack.c.b16 %v663, %v662
        %668 = vmatpush.bf16.msra.mxu0 0
        %669 = vmatpush.bf16.msra.mxu0 0
        %670 = vmatpush.bf16.msra.mxu0 0
        %671 = vmatpush.bf16.msra.mxu0 0
        %672 = vmatpush.bf16.msra.mxu0 0
        %673 = vmatpush.bf16.msra.mxu0 0
        %674 = vmatpush.bf16.msra.mxu0 %v665
        %675 = vmatpush.bf16.msra.mxu0 %v664
        %676 = vmatmul.bf16.gmra.mxu0 %v459
        %v677 = vpop.f32.mrf.mxu0
        %v678 = vadd.f32 %v576, %v677
        %v679 = vpop.f32.mrf.mxu0
        %680 = vdwg.mxu0
        %v681 = vld [vmem:[%s6] sm:$0xf]
        %v682 = vld [vmem:[%s6 + $0x4] sm:$0xf]
        %v683 = vld [vmem:[%s6 + $0x8] sm:$0xf]
        %v684 = vld [vmem:[%s6 + $0xc] sm:$0xf]
        %v685 = vld [vmem:[%s6 + $0x10] sm:$0xf]
        %v686 = vld [vmem:[%s6 + $0x14] sm:$0xf]
        %v687 = vld [vmem:[%s6 + $0x18] sm:$0xf]
        %v688 = vld [vmem:[%s6 + $0x1c] sm:$0xf]
        %v689 = vld [vmem:[%s6 + $0x20] sm:$0xf]
        %v690 = vld [vmem:[%s6 + $0x24] sm:$0xf]
        %v691 = vld [vmem:[%s6 + $0x28] sm:$0xf]
        %v692 = vld [vmem:[%s6 + $0x2c] sm:$0xf]
        %v693 = vld [vmem:[%s6 + $0x30] sm:$0xf]
        %v694 = vld [vmem:[%s6 + $0x34] sm:$0xf]
        %v695 = vld [vmem:[%s6 + $0x38] sm:$0xf]
        %v696 = vld [vmem:[%s6 + $0x3c] sm:$0xf]
        %v697 = vld [vmem:[%s7] sm:$0x1]
        %v698 = vld [vmem:[%s7 + $0x1] sm:$0x1]
        %v699 = vld [vmem:[%s7 + $0x2] sm:$0x1]
        %v700 = vld [vmem:[%s7 + $0x3] sm:$0x1]
        %v705 = vperm.slane %v697, 0
        %v706 = vperm.slane %v698, 0
        %v707 = vperm.slane %v699, 0
        %v708 = vperm.slane %v700, 0
        %v717 = vunpack.c.l.b16 %v681
        %v718 = vunpack.c.l.b16 %v682
        %v719 = vunpack.c.l.b16 %v683
        %v720 = vunpack.c.l.b16 %v684
        %v721 = vpack.c.b16 %v718, %v717
        %v722 = vpack.c.b16 %v720, %v719
        %v726 = vsel %vm457, %v412, 0
        %728 = vmatpush.bf16.msra.mxu0 0
        %729 = vmatpush.bf16.msra.mxu0 0
        %730 = vmatpush.bf16.msra.mxu0 0
        %731 = vmatpush.bf16.msra.mxu0 0
        %732 = vmatpush.bf16.msra.mxu0 0
        %733 = vmatpush.bf16.msra.mxu0 0
        %734 = vmatpush.bf16.msra.mxu0 %v722
        %735 = vmatpush.bf16.msra.mxu0 %v721
        %736 = vmatmul.bf16.gmra.mxu0 %v726
        %v737 = vpop.f32.mrf.mxu0
        %v738 = vadd.f32 %v705, %v737
        %v739 = vpop.f32.mrf.mxu0
        %740 = vdwg.mxu0
        %v745 = vunpack.c.l.b16 %v685
        %v746 = vunpack.c.l.b16 %v686
        %v747 = vunpack.c.l.b16 %v687
        %v748 = vunpack.c.l.b16 %v688
        %v749 = vpack.c.b16 %v746, %v745
        %v750 = vpack.c.b16 %v748, %v747
        %753 = vmatpush.bf16.msra.mxu0 0
        %754 = vmatpush.bf16.msra.mxu0 0
        %755 = vmatpush.bf16.msra.mxu0 0
        %756 = vmatpush.bf16.msra.mxu0 0
        %757 = vmatpush.bf16.msra.mxu0 0
        %758 = vmatpush.bf16.msra.mxu0 0
        %759 = vmatpush.bf16.msra.mxu0 %v750
        %760 = vmatpush.bf16.msra.mxu0 %v749
        %761 = vmatmul.bf16.gmra.mxu0 %v726
        %v762 = vpop.f32.mrf.mxu0
        %v763 = vadd.f32 %v706, %v762
        %v764 = vpop.f32.mrf.mxu0
        %765 = vdwg.mxu0
        %v770 = vunpack.c.l.b16 %v689
        %v771 = vunpack.c.l.b16 %v690
        %v772 = vunpack.c.l.b16 %v691
        %v773 = vunpack.c.l.b16 %v692
        %v774 = vpack.c.b16 %v771, %v770
        %v775 = vpack.c.b16 %v773, %v772
        %778 = vmatpush.bf16.msra.mxu0 0
        %779 = vmatpush.bf16.msra.mxu0 0
        %780 = vmatpush.bf16.msra.mxu0 0
        %781 = vmatpush.bf16.msra.mxu0 0
        %782 = vmatpush.bf16.msra.mxu0 0
        %783 = vmatpush.bf16.msra.mxu0 0
        %784 = vmatpush.bf16.msra.mxu0 %v775
        %785 = vmatpush.bf16.msra.mxu0 %v774
        %786 = vmatmul.bf16.gmra.mxu0 %v726
        %v787 = vpop.f32.mrf.mxu0
        %v788 = vadd.f32 %v707, %v787
        %v789 = vpop.f32.mrf.mxu0
        %790 = vdwg.mxu0
        %v795 = vunpack.c.l.b16 %v693
        %v796 = vunpack.c.l.b16 %v694
        %v797 = vunpack.c.l.b16 %v695
        %v798 = vunpack.c.l.b16 %v696
        %v799 = vpack.c.b16 %v796, %v795
        %v800 = vpack.c.b16 %v798, %v797
        %803 = vmatpush.bf16.msra.mxu0 0
        %804 = vmatpush.bf16.msra.mxu0 0
        %805 = vmatpush.bf16.msra.mxu0 0
        %806 = vmatpush.bf16.msra.mxu0 0
        %807 = vmatpush.bf16.msra.mxu0 0
        %808 = vmatpush.bf16.msra.mxu0 0
        %809 = vmatpush.bf16.msra.mxu0 %v800
        %810 = vmatpush.bf16.msra.mxu0 %v799
        %811 = vmatmul.bf16.gmra.mxu0 %v726
        %v812 = vpop.f32.mrf.mxu0
        %v813 = vadd.f32 %v708, %v812
        %v814 = vpop.f32.mrf.mxu0
        %815 = vdwg.mxu0
        %v816 = vmul.f32 %v471, 0.17677669
        %v817 = vmul.f32 %v496, 0.17677669
        %v818 = vmul.f32 %v521, 0.17677669
        %v819 = vmul.f32 %v546, 0.17677669
        %v820 = vpack.c.bf16 %v816, %v816
        %v821 = vpack.c.bf16 %v817, %v817
        %v822 = vpack.c.bf16 %v818, %v818
        %v823 = vpack.c.bf16 %v819, %v819
        %v824 = vpack.c.bf16 %v603, %v603
        %v825 = vpack.c.bf16 %v628, %v628
        %v826 = vpack.c.bf16 %v653, %v653
        %v827 = vpack.c.bf16 %v678, %v678
        %v828 = vpack.c.bf16 %v738, %v738
        %v829 = vpack.c.bf16 %v763, %v763
        %v830 = vpack.c.bf16 %v788, %v788
        %v831 = vpack.c.bf16 %v813, %v813
        %vm832 = vcmask 64512
        %v834 = vsel %vm832, %v820, 0
        %v837 = vsel %vm832, %v824, 0
        %839 = vmatpush.bf16.xpose.msra.mxu0 0
        %840 = vmatpush.bf16.xpose.msra.mxu0 0
        %841 = vmatpush.bf16.xpose.msra.mxu0 0
        %842 = vmatpush.bf16.xpose.msra.mxu0 0
        %843 = vmatpush.bf16.xpose.msra.mxu0 0
        %844 = vmatpush.bf16.xpose.msra.mxu0 0
        %845 = vmatpush.bf16.xpose.msra.mxu0 0
        %846 = vmatpush.bf16.xpose.msra.mxu0 %v837
        %847 = vmatmul.bf16.gmra.mxu0 %v834
        %v848 = vpop.f32.mrf.mxu0
        %v849 = vadd.f32 0.0, %v848
        %v850 = vpop.f32.mrf.mxu0
        %851 = vdwg.mxu0
        %v853 = vsel %vm832, %v821, 0
        %v856 = vsel %vm832, %v825, 0
        %858 = vmatpush.bf16.xpose.msra.mxu0 0
        %859 = vmatpush.bf16.xpose.msra.mxu0 0
        %860 = vmatpush.bf16.xpose.msra.mxu0 0
        %861 = vmatpush.bf16.xpose.msra.mxu0 0
        %862 = vmatpush.bf16.xpose.msra.mxu0 0
        %863 = vmatpush.bf16.xpose.msra.mxu0 0
        %864 = vmatpush.bf16.xpose.msra.mxu0 0
        %865 = vmatpush.bf16.xpose.msra.mxu0 %v856
        %866 = vmatmul.bf16.gmra.mxu0 %v853
        %v867 = vpop.f32.mrf.mxu0
        %v868 = vadd.f32 0.0, %v867
        %v869 = vpop.f32.mrf.mxu0
        %870 = vdwg.mxu0
        %v872 = vsel %vm832, %v822, 0
        %v875 = vsel %vm832, %v826, 0
        %877 = vmatpush.bf16.xpose.msra.mxu0 0
        %878 = vmatpush.bf16.xpose.msra.mxu0 0
        %879 = vmatpush.bf16.xpose.msra.mxu0 0
        %880 = vmatpush.bf16.xpose.msra.mxu0 0
        %881 = vmatpush.bf16.xpose.msra.mxu0 0
        %882 = vmatpush.bf16.xpose.msra.mxu0 0
        %883 = vmatpush.bf16.xpose.msra.mxu0 0
        %884 = vmatpush.bf16.xpose.msra.mxu0 %v875
        %885 = vmatmul.bf16.gmra.mxu0 %v872
        %v886 = vpop.f32.mrf.mxu0
        %v887 = vadd.f32 0.0, %v886
        %v888 = vpop.f32.mrf.mxu0
        %889 = vdwg.mxu0
        %v891 = vsel %vm832, %v823, 0
        %v894 = vsel %vm832, %v827, 0
        %896 = vmatpush.bf16.xpose.msra.mxu0 0
        %897 = vmatpush.bf16.xpose.msra.mxu0 0
        %898 = vmatpush.bf16.xpose.msra.mxu0 0
        %899 = vmatpush.bf16.xpose.msra.mxu0 0
        %900 = vmatpush.bf16.xpose.msra.mxu0 0
        %901 = vmatpush.bf16.xpose.msra.mxu0 0
        %902 = vmatpush.bf16.xpose.msra.mxu0 0
        %903 = vmatpush.bf16.xpose.msra.mxu0 %v894
        %904 = vmatmul.bf16.gmra.mxu0 %v891
        %v905 = vpop.f32.mrf.mxu0
        %v906 = vadd.f32 0.0, %v905
        %v907 = vpop.f32.mrf.mxu0
        %908 = vdwg.mxu0
        %v909 = vsel %vm832, %v849, -inf
        %910 = vmax.xlane.f32.xlu0 %v909
        %v911 = vpop.xlane.xlu0 %910
        %v912 = vsel %vm832, %v868, -inf
        %913 = vmax.xlane.f32.xlu0 %v912
        %v914 = vpop.xlane.xlu0 %913
        %v915 = vsel %vm832, %v887, -inf
        %916 = vmax.xlane.f32.xlu0 %v915
        %v917 = vpop.xlane.xlu0 %916
        %v918 = vsel %vm832, %v906, -inf
        %919 = vmax.xlane.f32.xlu0 %v918
        %v920 = vpop.xlane.xlu0 %919
        %v921 = vsub.f32 %v849, %v911
        %v922 = vsub.f32 %v868, %v914
        %v923 = vsub.f32 %v887, %v917
        %v924 = vsub.f32 %v906, %v920
        %v925 = vmul.f32 %v921, 1.442695
        %v926 = vpow.pop %v925
        %v927 = vmul.f32 %v922, 1.442695
        %v928 = vpow.pop %v927
        %v929 = vmul.f32 %v923, 1.442695
        %v930 = vpow.pop %v929
        %v931 = vmul.f32 %v924, 1.442695
        %v932 = vpow.pop %v931
        %v933 = vsel %vm832, %v926, 0.0
        %934 = vadd.xlane.f32.xlu0 %v933
        %v935 = vpop.xlane.xlu0 %934
        %v936 = vsel %vm832, %v928, 0.0
        %937 = vadd.xlane.f32.xlu0 %v936
        %v938 = vpop.xlane.xlu0 %937
        %v939 = vsel %vm832, %v930, 0.0
        %940 = vadd.xlane.f32.xlu0 %v939
        %v941 = vpop.xlane.xlu0 %940
        %v942 = vsel %vm832, %v932, 0.0
        %943 = vadd.xlane.f32.xlu0 %v942
        %v944 = vpop.xlane.xlu0 %943
        %v945 = vrcp.pop %v935
        %v946 = vrcp.pop %v938
        %v947 = vrcp.pop %v941
        %v948 = vrcp.pop %v944
        %v949 = vmul.f32 %v926, %v945
        %v950 = vmul.f32 %v928, %v946
        %v951 = vmul.f32 %v930, %v947
        %v952 = vmul.f32 %v932, %v948
        %953 = vst.msk [vmem:[%s401] sm:$0xff] %vm832, %v949
        %954 = vst.msk [vmem:[%s401 + $0x8] sm:$0xff] %vm832, %v950
        %955 = vst.msk [vmem:[%s401 + $0x10] sm:$0xff] %vm832, %v951
        %956 = vst.msk [vmem:[%s401 + $0x18] sm:$0xff] %vm832, %v952
        %v957 = vpack.c.bf16 %v949, %v949
        %v958 = vpack.c.bf16 %v950, %v950
        %v959 = vpack.c.bf16 %v951, %v951
        %v960 = vpack.c.bf16 %v952, %v952
        %v962 = vsel %vm832, %v957, 0
        %vm964 = vcmask 1043456
        %v966 = vsel %vm964, %v828, 0
        %968 = vmatpush.bf16.msra.mxu0 0
        %969 = vmatpush.bf16.msra.mxu0 0
        %970 = vmatpush.bf16.msra.mxu0 0
        %971 = vmatpush.bf16.msra.mxu0 0
        %972 = vmatpush.bf16.msra.mxu0 0
        %973 = vmatpush.bf16.msra.mxu0 0
        %974 = vmatpush.bf16.msra.mxu0 0
        %975 = vmatpush.bf16.msra.mxu0 %v966
        %976 = vmatmul.bf16.gmra.mxu0 %v962
        %v977 = vpop.f32.mrf.mxu0
        %v978 = vadd.f32 0.0, %v977
        %v979 = vpop.f32.mrf.mxu0
        %980 = vdwg.mxu0
        %v982 = vsel %vm832, %v958, 0
        %v985 = vsel %vm964, %v829, 0
        %987 = vmatpush.bf16.msra.mxu0 0
        %988 = vmatpush.bf16.msra.mxu0 0
        %989 = vmatpush.bf16.msra.mxu0 0
        %990 = vmatpush.bf16.msra.mxu0 0
        %991 = vmatpush.bf16.msra.mxu0 0
        %992 = vmatpush.bf16.msra.mxu0 0
        %993 = vmatpush.bf16.msra.mxu0 0
        %994 = vmatpush.bf16.msra.mxu0 %v985
        %995 = vmatmul.bf16.gmra.mxu0 %v982
        %v996 = vpop.f32.mrf.mxu0
        %v997 = vadd.f32 0.0, %v996
        %v998 = vpop.f32.mrf.mxu0
        %999 = vdwg.mxu0
        %v1001 = vsel %vm832, %v959, 0
        %v1004 = vsel %vm964, %v830, 0
        %1006 = vmatpush.bf16.msra.mxu0 0
        %1007 = vmatpush.bf16.msra.mxu0 0
        %1008 = vmatpush.bf16.msra.mxu0 0
        %1009 = vmatpush.bf16.msra.mxu0 0
        %1010 = vmatpush.bf16.msra.mxu0 0
        %1011 = vmatpush.bf16.msra.mxu0 0
        %1012 = vmatpush.bf16.msra.mxu0 0
        %1013 = vmatpush.bf16.msra.mxu0 %v1004
        %1014 = vmatmul.bf16.gmra.mxu0 %v1001
        %v1015 = vpop.f32.mrf.mxu0
        %v1016 = vadd.f32 0.0, %v1015
        %v1017 = vpop.f32.mrf.mxu0
        %1018 = vdwg.mxu0
        %v1020 = vsel %vm832, %v960, 0
        %v1023 = vsel %vm964, %v831, 0
        %1025 = vmatpush.bf16.msra.mxu0 0
        %1026 = vmatpush.bf16.msra.mxu0 0
        %1027 = vmatpush.bf16.msra.mxu0 0
        %1028 = vmatpush.bf16.msra.mxu0 0
        %1029 = vmatpush.bf16.msra.mxu0 0
        %1030 = vmatpush.bf16.msra.mxu0 0
        %1031 = vmatpush.bf16.msra.mxu0 0
        %1032 = vmatpush.bf16.msra.mxu0 %v1023
        %1033 = vmatmul.bf16.gmra.mxu0 %v1020
        %v1034 = vpop.f32.mrf.mxu0
        %v1035 = vadd.f32 0.0, %v1034
        %v1036 = vpop.f32.mrf.mxu0
        %1037 = vdwg.mxu0
        %v1038 = vpack.c.bf16 %v978, %v978
        %v1039 = vpack.c.bf16 %v997, %v997
        %v1040 = vpack.c.bf16 %v1016, %v1016
        %v1041 = vpack.c.bf16 %v1035, %v1035
        %v1042 = vld [vmem:[%s8] sm:$0xf]
        %v1043 = vld [vmem:[%s8 + $0x4] sm:$0xf]
        %v1044 = vld [vmem:[%s8 + $0x8] sm:$0xf]
        %v1045 = vld [vmem:[%s8 + $0xc] sm:$0xf]
        %v1047 = vsel %vm832, %v1038, 0
        %v1050 = vsel %vm964, %v1042, 0
        %1052 = vmatpush.bf16.msra.mxu0 0
        %1053 = vmatpush.bf16.msra.mxu0 0
        %1054 = vmatpush.bf16.msra.mxu0 0
        %1055 = vmatpush.bf16.msra.mxu0 0
        %1056 = vmatpush.bf16.msra.mxu0 0
        %1057 = vmatpush.bf16.msra.mxu0 0
        %1058 = vmatpush.bf16.msra.mxu0 0
        %1059 = vmatpush.bf16.msra.mxu0 %v1050
        %1060 = vmatmul.bf16.gmra.mxu0 %v1047
        %v1061 = vpop.f32.mrf.mxu0
        %v1062 = vadd.f32 0.0, %v1061
        %v1063 = vpop.f32.mrf.mxu0
        %1064 = vdwg.mxu0
        %v1066 = vsel %vm832, %v1039, 0
        %v1069 = vsel %vm964, %v1043, 0
        %1071 = vmatpush.bf16.msra.mxu0 0
        %1072 = vmatpush.bf16.msra.mxu0 0
        %1073 = vmatpush.bf16.msra.mxu0 0
        %1074 = vmatpush.bf16.msra.mxu0 0
        %1075 = vmatpush.bf16.msra.mxu0 0
        %1076 = vmatpush.bf16.msra.mxu0 0
        %1077 = vmatpush.bf16.msra.mxu0 0
        %1078 = vmatpush.bf16.msra.mxu0 %v1069
        %1079 = vmatmul.bf16.gmra.mxu0 %v1066
        %v1080 = vpop.f32.mrf.mxu0
        %v1081 = vadd.f32 0.0, %v1080
        %v1082 = vpop.f32.mrf.mxu0
        %1083 = vdwg.mxu0
        %v1085 = vsel %vm832, %v1040, 0
        %v1088 = vsel %vm964, %v1044, 0
        %1090 = vmatpush.bf16.msra.mxu0 0
        %1091 = vmatpush.bf16.msra.mxu0 0
        %1092 = vmatpush.bf16.msra.mxu0 0
        %1093 = vmatpush.bf16.msra.mxu0 0
        %1094 = vmatpush.bf16.msra.mxu0 0
        %1095 = vmatpush.bf16.msra.mxu0 0
        %1096 = vmatpush.bf16.msra.mxu0 0
        %1097 = vmatpush.bf16.msra.mxu0 %v1088
        %1098 = vmatmul.bf16.gmra.mxu0 %v1085
        %v1099 = vpop.f32.mrf.mxu0
        %v1100 = vadd.f32 0.0, %v1099
        %v1101 = vpop.f32.mrf.mxu0
        %1102 = vdwg.mxu0
        %v1104 = vsel %vm832, %v1041, 0
        %v1107 = vsel %vm964, %v1045, 0
        %1109 = vmatpush.bf16.msra.mxu0 0
        %1110 = vmatpush.bf16.msra.mxu0 0
        %1111 = vmatpush.bf16.msra.mxu0 0
        %1112 = vmatpush.bf16.msra.mxu0 0
        %1113 = vmatpush.bf16.msra.mxu0 0
        %1114 = vmatpush.bf16.msra.mxu0 0
        %1115 = vmatpush.bf16.msra.mxu0 0
        %1116 = vmatpush.bf16.msra.mxu0 %v1107
        %1117 = vmatmul.bf16.gmra.mxu0 %v1104
        %v1118 = vpop.f32.mrf.mxu0
        %v1119 = vadd.f32 0.0, %v1118
        %v1120 = vpop.f32.mrf.mxu0
        %1121 = vdwg.mxu0
        %v1122 = vsel %vm457, %v1062, 0.0
        %v1123 = vsel %vm457, %v1081, 0.0
        %v1124 = vadd.f32 %v1122, %v1123
        %v1125 = vsel %vm457, %v1100, 0.0
        %v1126 = vadd.f32 %v1124, %v1125
        %v1127 = vsel %vm457, %v1119, 0.0
        %v1128 = vadd.f32 %v1126, %v1127
        %v1129 = vld [vmem:[%s9] sm:$0x1]
        %v1131 = vperm.slane %v1129, 0
        %v1133 = vadd.f32 %v1128, %v1131
        %1134 = vst.msk [vmem:[%s394] sm:$0xff] %vm457, %v1133
        %s1135 = sand.u32 %s257, 1
        %s1136 = scalar_lea.sflag [#allocation3], %s1135
        %s1137 = sand.u32 %s257, 1
        %s1138 = smul.addr %s1137, 8
        %s1139 = scalar_lea.vmem [#allocation2], %s1138
        %s1140 = sand.u32 %s283, 1
        %s1141 = scalar_lea.sflag [#allocation5], %s1140
        %s1142 = sand.u32 %s283, 1
        %s1143 = smul.addr %s1142, 32
        %s1144 = scalar_lea.vmem [#allocation4], %s1143
        // Predicated region
        $region61: #{tpu_custom_call.1} parent=59 // pred_check
          %p1145 = pneg %p267
        $region62: #{tpu_custom_call.1} parent=59 // pred_check_branch
          %1147 = sbr.rel (%p1145) target = $region64
        $region63: #{tpu_custom_call.1} parent=59 // pred_region
          %1149 = vsyncadd %s1136, 0
          %s1150 = smul.addr %s29, 8
          %s1151 = scalar_lea.hbm %s10, %s1150
          %s1153 = sshll.u32 %s1139, 4
          %s1154 = int_to_ptr.vmem [resolvable:$true] %s1153
          %s1155 = sshll.u32 %s1151, 4
          %s1156 = int_to_ptr.hbm [resolvable:$true] %s1155
          %1158 = dma.vmem_to_hbm [thread:$0]  %s1154, 128, %s1156, %s1136
        $region64: #{tpu_custom_call.1} parent=59 // pred_fallthru
          _
        // Predicated region
        $region65: #{tpu_custom_call.1} parent=59 // pred_check
          %p1159 = pneg %p293
        $region66: #{tpu_custom_call.1} parent=59 // pred_check_branch
          %1161 = sbr.rel (%p1159) target = $region68
        $region67: #{tpu_custom_call.1} parent=59 // pred_region
          %1163 = vsyncadd %s1141, 0
          %s1164 = smul.addr %s29, 4
          %s1165 = smul.addr %s1164, 8
          %s1166 = scalar_lea.hbm %s11, %s1165
          %s1167 = sshll.u32 %s1144, 4
          %s1168 = int_to_ptr.vmem [resolvable:$true] %s1167
          %s1169 = sshll.u32 %s1166, 4
          %s1170 = int_to_ptr.hbm [resolvable:$true] %s1169
          %1175 = dma.vmem_to_hbm [thread:$0]  %s1168, 512, %s1170, %s1141, 128, 128, 8
        $region68: #{tpu_custom_call.1} parent=59 // pred_fallthru
          _
      $region60: #{tpu_custom_call.1} parent=5 // pred_fallthru
        _
      %p1176 = scmp.le.s32.totalorder 2, %s24
      // Predicated region
      $region69: #{tpu_custom_call.1} parent=5 // pred_check
        %p1177 = pneg %p1176
      $region70: #{tpu_custom_call.1} parent=5 // pred_check_branch
        %1179 = sbr.rel (%p1177) target = $region72
      $region71: #{tpu_custom_call.1} parent=5 // pred_region
        %s1180 = ssub.s32 %s24, 2
        // Predicated region
        $region73: #{tpu_custom_call.1} parent=71 // pred_check
          %p1181 = pneg %p273
        $region74: #{tpu_custom_call.1} parent=71 // pred_check_branch
          %1183 = sbr.rel (%p1181) target = $region76
        $region75: #{tpu_custom_call.1} parent=71 // pred_region
          %s1184 = sand.u32 %s258, 1
          %s1185 = scalar_lea.sflag [#allocation3], %s1184
          %s1186 = sand.u32 %s258, 1
          %s1187 = smul.addr %s1186, 8
          %s1188 = scalar_lea.vmem [#allocation2], %s1187
          %1190 = dma.done %s1185, 128
        $region76: #{tpu_custom_call.1} parent=71 // pred_fallthru
          _
        // Predicated region
        $region77: #{tpu_custom_call.1} parent=71 // pred_check
          %p1191 = pneg %p299
        $region78: #{tpu_custom_call.1} parent=71 // pred_check_branch
          %1193 = sbr.rel (%p1191) target = $region80
        $region79: #{tpu_custom_call.1} parent=71 // pred_region
          %s1194 = sand.u32 %s284, 1
          %s1195 = scalar_lea.sflag [#allocation5], %s1194
          %s1196 = sand.u32 %s284, 1
          %s1197 = smul.addr %s1196, 32
          %s1198 = scalar_lea.vmem [#allocation4], %s1197
          %1200 = dma.done %s1195, 512
        $region80: #{tpu_custom_call.1} parent=71 // pred_fallthru
          _
      $region72: #{tpu_custom_call.1} parent=5 // pred_fallthru
        _
    $region6: #{tpu_custom_call.1} parent=1 // loop_footer
      %s28 = sadd.s32 1, %s24
    $region7: #{tpu_custom_call.1} parent=1 // loop_footer_branch
      %23 = sbr.rel target = $region3
    $region8: #{tpu_custom_call.1} parent=1 // loop_exit
      _
    %1201 = vsyncpa [#allocation3], 1
    %s1202 = scalar_lea.sflag [#allocation3], 1
    %1203 = vsyncpa %s1202, 1
    %1204 = vsyncpa [#allocation5], 1
    %s1205 = scalar_lea.sflag [#allocation5], 1
    %1206 = vsyncpa %s1205, 1

</llo_original>
